<compile_context>
chip_gen: v5e
topology: v5e:2x2
jax: 0.10.0
libtpu: 0.0.40
codegen_flags: <defaults>
</compile_context>

<pallas_src>
import jax
import jax.numpy as jnp
from jax.experimental import pallas as pl
from jax.experimental.pallas import tpu as pltpu


def _make_qknorm_kernel(head_dim: int):
    inv_d = 1.0 / float(head_dim)
    eps = 1e-6

    def kernel(q_ref, k_ref, qs_ref, ks_ref, seg_ref, qo_ref, ko_ref):
        seg = seg_ref[...]      # (W, W) block-diagonal ones, resident across steps
        qs = qs_ref[...]        # (1, W) tiled scale (hoisted once per tile)
        ks = ks_ref[...]

        def rmsnorm(x_ref, scale, o_ref):
            x = x_ref[...]
            xf = x.astype(jnp.float32)
            # Segmented reduce: ssq[r, j] = sum over lanes in j's D-wide group of xf^2.
            # One MXU matmul against the block-diagonal ones matrix broadcasts each
            # group's sum across its own lanes (no keepdims / cross-lane broadcast).
            ssq = jnp.dot(xf * xf, seg, preferred_element_type=jnp.float32)
            rrms = jax.lax.rsqrt(ssq * inv_d + eps)
            # PyTorch RMSNorm: (x * rrms).to(x.dtype) * scale; QKNorm then .to(v.dtype)
            y = (xf * rrms).astype(x.dtype).astype(jnp.float32) * scale
            o_ref[...] = y.astype(o_ref.dtype)

        rmsnorm(q_ref, qs, qo_ref)
        rmsnorm(k_ref, ks, ko_ref)

    return kernel


def qknorm(q, k, v, query_scale, key_scale, *, tile_rows=None):
    """QKNorm: RMSNorm(q) and RMSNorm(k) over the last dim, cast to v.dtype.

    q, k: [..., D] (e.g. [B, H, L, D]).  v only supplies the output dtype
    (matching PyTorch's `.to(v)`).  `tile_rows` can be swept per generation.
    """
    orig_shape = q.shape
    D = int(orig_shape[-1])
    R = 1
    for s in orig_shape[:-1]:
        R *= int(s)
    out_dtype = v.dtype

    # Lane-dense packing: pack `pack` consecutive rows into one 128-lane-wide row.
    if D < 128 and 128 % D == 0 and R % (128 // D) == 0:
        pack = 128 // D
    else:
        pack = 1
    W = pack * D
    R2 = R // pack

    q2 = q.reshape(R2, W)
    k2 = k.reshape(R2, W)
    qs = jnp.tile(query_scale.astype(jnp.float32).reshape(-1), (pack,)).reshape(1, W)
    ks = jnp.tile(key_scale.astype(jnp.float32).reshape(-1), (pack,)).reshape(1, W)

    # Block-diagonal ones: seg[i, j] = 1 iff lanes i and j are in the same D-wide group.
    lane = jnp.arange(W)
    seg = (lane[:, None] // D == lane[None, :] // D).astype(jnp.float32)

    in_bytes = q2.dtype.itemsize
    out_bytes = jnp.dtype(out_dtype).itemsize

    # Tile size: as large as a conservative VMEM budget allows (q, k, qo, ko each
    # double-buffered), capped at tile_rows (default 8192), rounded to a sublane
    # multiple of both dtypes.  24 MiB working budget is safe on v7x's 64 MiB VMEM
    # and leaves plenty of headroom on v5e/v6e's 128 MiB.
    budget = 24 * 1024 * 1024
    bytes_per_row = 2 * W * (2 * in_bytes + 2 * out_bytes)   # includes double-buffering
    cap = max(8, budget // bytes_per_row)
    want = tile_rows if tile_rows is not None else 8192
    tm = int(min(want, cap, R2))
    sub = max(32 // max(in_bytes, 1), 32 // max(out_bytes, 1), 8)
    if tm < R2:
        tm = max(sub, (tm // sub) * sub)
        tm = min(tm, R2)

    grid = (pl.cdiv(R2, tm),)

    row_spec = pl.BlockSpec((tm, W), lambda i: (i, 0))
    vec_spec = pl.BlockSpec((1, W), lambda i: (0, 0))
    seg_spec = pl.BlockSpec((W, W), lambda i: (0, 0))

    working = bytes_per_row * tm + (W * W + 2 * W) * 4
    vmem_limit = int(min(max(working + (8 << 20), 32 << 20), 48 << 20))

    qo, ko = pl.pallas_call(
        _make_qknorm_kernel(D),
        grid=grid,
        in_specs=[row_spec, row_spec, vec_spec, vec_spec, seg_spec],
        out_specs=[row_spec, row_spec],
        out_shape=(
            jax.ShapeDtypeStruct((R2, W), out_dtype),
            jax.ShapeDtypeStruct((R2, W), out_dtype),
        ),
        compiler_params=pltpu.CompilerParams(
            dimension_semantics=("parallel",),
            vmem_limit_bytes=vmem_limit,
        ),
    )(q2, k2, qs, ks, seg)

    return qo.reshape(orig_shape), ko.reshape(orig_shape)


def _reference_qknorm(q, k, v, query_scale, key_scale):
    def rmsnorm(x, scale):
        xf = x.astype(jnp.float32)
        rrms = jax.lax.rsqrt(jnp.mean(xf * xf, axis=-1, keepdims=True) + 1e-6)
        return (xf * rrms).astype(x.dtype).astype(jnp.float32) * scale.astype(jnp.float32)

    return (
        rmsnorm(q, query_scale).astype(v.dtype),
        rmsnorm(k, key_scale).astype(v.dtype),
    )


if __name__ == "__main__":
    root = jax.random.PRNGKey(0)

    def run_case(B, H, L, D, v_dtype):
        ks = jax.random.split(jax.random.fold_in(root, B * 1000 + H * 100 + L), 5)
        kq, kk, kv, ks1, ks2 = ks
        q = jax.random.normal(kq, (B, H, L, D), dtype=jnp.float32)
        k = jax.random.normal(kk, (B, H, L, D), dtype=jnp.float32)
        v = jax.random.normal(kv, (B, H, L, D), dtype=jnp.float32).astype(v_dtype)
        # RMSNorm.scale is initialized to ones; perturb so the multiply is exercised.
        query_scale = jnp.ones((D,), jnp.float32) + 0.01 * jax.random.normal(ks1, (D,))
        key_scale = jnp.ones((D,), jnp.float32) + 0.01 * jax.random.normal(ks2, (D,))

        q_out, k_out = qknorm(q, k, v, query_scale, key_scale)
        jax.block_until_ready((q_out, k_out))

        q_ref, k_ref = _reference_qknorm(q, k, v, query_scale, key_scale)
        assert q_out.shape == q.shape and k_out.shape == k.shape
        assert q_out.dtype == v.dtype and k_out.dtype == v.dtype
        tol = 1e-5 if v_dtype == jnp.float32 else 2e-2
        assert jnp.allclose(q_out.astype(jnp.float32), q_ref.astype(jnp.float32),
                            atol=tol, rtol=tol)
        assert jnp.allclose(k_out.astype(jnp.float32), k_ref.astype(jnp.float32),
                            atol=tol, rtol=tol)

    # Model-like head_dim=64 (hidden=1024 / 16 heads) -> lane-packed path (2 rows / 128 lanes).
    run_case(2, 4, 8, 64, jnp.float32)
    # Odd row count + bf16 output dtype -> unpacked fallback path and the .to(v) cast.
    run_case(1, 3, 5, 64, jnp.bfloat16)

    print("KERNEL_OK")
</pallas_src>

<mosaic_0001>
module attributes {stable_mosaic.version = 11 : i64} {
  func.func @kernel(%arg0: i32, %arg1: memref<32x128xf32, #tpu.memory_space<vmem>>, %arg2: memref<32x128xf32, #tpu.memory_space<vmem>>, %arg3: memref<1x128xf32, #tpu.memory_space<vmem>>, %arg4: memref<1x128xf32, #tpu.memory_space<vmem>>, %arg5: memref<128x128xf32, #tpu.memory_space<vmem>>, %arg6: memref<32x128xf32, #tpu.memory_space<vmem>>, %arg7: memref<32x128xf32, #tpu.memory_space<vmem>>) attributes {dimension_semantics = [#tpu.dimension_semantics<parallel>], iteration_bounds = array<i64: 1>, scalar_prefetch = 0 : i64, scratch_operands = 0 : i64, tpu.core_type = #tpu.core_type<tc>, window_params = [{transform_indices = @transform_0, window_bounds = array<i64: 32, 128>}, {transform_indices = @transform_1, window_bounds = array<i64: 32, 128>}, {pipeline_mode = #tpu.pipeline_mode<synchronous>, transform_indices = @transform_2, window_bounds = array<i64: 1, 128>}, {pipeline_mode = #tpu.pipeline_mode<synchronous>, transform_indices = @transform_3, window_bounds = array<i64: 1, 128>}, {pipeline_mode = #tpu.pipeline_mode<synchronous>, transform_indices = @transform_4, window_bounds = array<i64: 128, 128>}, {transform_indices = @transform_5, window_bounds = array<i64: 32, 128>}, {transform_indices = @transform_6, window_bounds = array<i64: 32, 128>}]} {
    %c0 = arith.constant 0 : index
    %c0_0 = arith.constant 0 : index
    %0 = vector.load %arg5[%c0, %c0_0] : memref<128x128xf32, #tpu.memory_space<vmem>>, vector<128x128xf32>
    %c0_1 = arith.constant 0 : index
    %c0_2 = arith.constant 0 : index
    %1 = vector.load %arg3[%c0_1, %c0_2] : memref<1x128xf32, #tpu.memory_space<vmem>>, vector<1x128xf32>
    %c0_3 = arith.constant 0 : index
    %c0_4 = arith.constant 0 : index
    %2 = vector.load %arg4[%c0_3, %c0_4] : memref<1x128xf32, #tpu.memory_space<vmem>>, vector<1x128xf32>
    %c0_5 = arith.constant 0 : index
    %c0_6 = arith.constant 0 : index
    %3 = vector.load %arg1[%c0_5, %c0_6] : memref<32x128xf32, #tpu.memory_space<vmem>>, vector<32x128xf32>
    %4 = arith.mulf %3, %3 : vector<32x128xf32>
    %cst = arith.constant dense<0.000000e+00> : vector<32x128xf32>
    %5 = tpu.matmul %4, %0, %cst {dimension_numbers = #tpu.dot_dimension_numbers<[1], [0], [0], [1], [0, 0, 1, 1], [], []>} : vector<32x128xf32>, vector<128x128xf32>, vector<32x128xf32> -> vector<32x128xf32>
    %cst_7 = arith.constant 1.562500e-02 : f32
    %6 = vector.broadcast %cst_7 : f32 to vector<32x128xf32>
    %7 = arith.mulf %5, %6 : vector<32x128xf32>
    %cst_8 = arith.constant 9.99999997E-7 : f32
    %8 = vector.broadcast %cst_8 : f32 to vector<32x128xf32>
    %9 = arith.addf %7, %8 : vector<32x128xf32>
    %10 = math.rsqrt %9 : vector<32x128xf32>
    %11 = arith.mulf %3, %10 : vector<32x128xf32>
    %12 = vector.broadcast %1 : vector<1x128xf32> to vector<32x128xf32>
    %13 = arith.mulf %11, %12 : vector<32x128xf32>
    %c0_9 = arith.constant 0 : index
    %c0_10 = arith.constant 0 : index
    %14 = vector.load %arg6[%c0_9, %c0_10] : memref<32x128xf32, #tpu.memory_space<vmem>>, vector<32x128xf32>
    tpu.vector_store %arg6[%c0_9, %c0_10], %13 {strides = array<i32>} : memref<32x128xf32, #tpu.memory_space<vmem>>, vector<32x128xf32>,
    %c0_11 = arith.constant 0 : index
    %c0_12 = arith.constant 0 : index
    %15 = vector.load %arg2[%c0_11, %c0_12] : memref<32x128xf32, #tpu.memory_space<vmem>>, vector<32x128xf32>
    %16 = arith.mulf %15, %15 : vector<32x128xf32>
    %cst_13 = arith.constant dense<0.000000e+00> : vector<32x128xf32>
    %17 = tpu.matmul %16, %0, %cst_13 {dimension_numbers = #tpu.dot_dimension_numbers<[1], [0], [0], [1], [0, 0, 1, 1], [], []>} : vector<32x128xf32>, vector<128x128xf32>, vector<32x128xf32> -> vector<32x128xf32>
    %cst_14 = arith.constant 1.562500e-02 : f32
    %18 = vector.broadcast %cst_14 : f32 to vector<32x128xf32>
    %19 = arith.mulf %17, %18 : vector<32x128xf32>
    %cst_15 = arith.constant 9.99999997E-7 : f32
    %20 = vector.broadcast %cst_15 : f32 to vector<32x128xf32>
    %21 = arith.addf %19, %20 : vector<32x128xf32>
    %22 = math.rsqrt %21 : vector<32x128xf32>
    %23 = arith.mulf %15, %22 : vector<32x128xf32>
    %24 = vector.broadcast %2 : vector<1x128xf32> to vector<32x128xf32>
    %25 = arith.mulf %23, %24 : vector<32x128xf32>
    %c0_16 = arith.constant 0 : index
    %c0_17 = arith.constant 0 : index
    %26 = vector.load %arg7[%c0_16, %c0_17] : memref<32x128xf32, #tpu.memory_space<vmem>>, vector<32x128xf32>
    tpu.vector_store %arg7[%c0_16, %c0_17], %25 {strides = array<i32>} : memref<32x128xf32, #tpu.memory_space<vmem>>, vector<32x128xf32>,
    return
  }
  func.func @transform_0(%arg0: i32) -> (i32, i32) {
    %c0_i32 = arith.constant 0 : i32
    %c0_i32_0 = arith.constant 0 : i32
    return %arg0, %c0_i32 : i32, i32
  }
  func.func @transform_1(%arg0: i32) -> (i32, i32) {
    %c0_i32 = arith.constant 0 : i32
    %c0_i32_0 = arith.constant 0 : i32
    return %arg0, %c0_i32 : i32, i32
  }
  func.func @transform_2(%arg0: i32) -> (i32, i32) {
    %c0_i32 = arith.constant 0 : i32
    %c0_i32_0 = arith.constant 0 : i32
    %c0_i32_1 = arith.constant 0 : i32
    return %c0_i32, %c0_i32_0 : i32, i32
  }
  func.func @transform_3(%arg0: i32) -> (i32, i32) {
    %c0_i32 = arith.constant 0 : i32
    %c0_i32_0 = arith.constant 0 : i32
    %c0_i32_1 = arith.constant 0 : i32
    return %c0_i32, %c0_i32_0 : i32, i32
  }
  func.func @transform_4(%arg0: i32) -> (i32, i32) {
    %c0_i32 = arith.constant 0 : i32
    %c0_i32_0 = arith.constant 0 : i32
    %c0_i32_1 = arith.constant 0 : i32
    return %c0_i32, %c0_i32_0 : i32, i32
  }
  func.func @transform_5(%arg0: i32) -> (i32, i32) {
    %c0_i32 = arith.constant 0 : i32
    %c0_i32_0 = arith.constant 0 : i32
    return %arg0, %c0_i32 : i32, i32
  }
  func.func @transform_6(%arg0: i32) -> (i32, i32) {
    %c0_i32 = arith.constant 0 : i32
    %c0_i32_0 = arith.constant 0 : i32
    return %arg0, %c0_i32 : i32, i32
  }
}

</mosaic_0001>

<llo_original>
// kernel: tpu_custom_call.1
$region0: #{tpu_custom_call.1}
  #allocation0 [shape = 'u32[]', space=smem, size = 0x4, offset = 0x4, fixed_abs, tag = 'smem constant byte address 0x4 - core index']
  #allocation1 [shape = 'u32[72,128]{1,0:T(1,128)}', space=vmem, size = 0x9000, scoped, tag = 'internal scratch']
  %s0 = inlined_call_operand.hbm [shape: f32[32,128], index: 0, kind: input, shape index: {}]
  %s1 = inlined_call_operand.hbm [shape: f32[32,128], index: 1, kind: input, shape index: {}]
  %s2 = inlined_call_operand.vmem [shape: f32[1,128], index: 2, kind: input, shape index: {}]
  %s3 = inlined_call_operand.vmem [shape: f32[1,128], index: 3, kind: input, shape index: {}]
  %s4 = inlined_call_operand.hbm [shape: f32[128,128], index: 4, kind: input, shape index: {}]
  %s5 = inlined_call_operand.hbm [shape: f32[32,128], index: 5, kind: output, shape index: {0}]
  %s6 = inlined_call_operand.hbm [shape: f32[32,128], index: 6, kind: output, shape index: {1}]
  %7 = xla_tuple %s5, %s6
  %s8 = sld [smem:[#allocation0]]
  $region50: #{tpu_custom_call.1} parent=0
    _
  %s10 = ssub.s32 1, %s8
  %s11 = scalar_select 0, %s10, %s8
  $region1: #{tpu_custom_call.1} parent=0
    #allocation2 [shape = 'u8[16384]{0}', space=vmem, size = 0x4000, scoped, tag = 'input window, operand 0, single buffered']
    #allocation3 [shape = 's32[1]{0}', space=sflag, size = 0x4, scoped, tag = 'scoped memory for tpu_custom_call.1']
    #allocation4 [shape = 's32[1]{0}', space=sflag, size = 0x4, scoped, tag = 'scoped memory for tpu_custom_call.1']
    #allocation5 [shape = 'u8[16384]{0}', space=vmem, size = 0x4000, scoped, tag = 'input window, operand 1, single buffered']
    #allocation6 [shape = 's32[1]{0}', space=sflag, size = 0x4, scoped, tag = 'scoped memory for tpu_custom_call.1']
    #allocation7 [shape = 'u8[65536]{0}', space=vmem, size = 0x10000, scoped, tag = 'input window, operand 4, single buffered']
    #allocation8 [shape = 'u8[16384]{0}', space=vmem, size = 0x4000, scoped, tag = 'output window, operand 0, single buffered']
    #allocation9 [shape = 'u8[16384]{0}', space=vmem, size = 0x4000, scoped, tag = 'output window, operand 1, single buffered']
    #allocation10 [shape = 's32[1]{0}', space=sflag, size = 0x4, scoped, tag = 'scoped memory for tpu_custom_call.1']
    %12 = vsyncpa [#allocation3], 0
    %13 = vsyncpa [#allocation6], 0
    %14 = vsyncpa [#allocation4], 0
    %15 = vsyncpa [#allocation10], 0
    // Predicated region
    $region2: #{tpu_custom_call.1} parent=1 // pred_check
      _
    $region3: #{tpu_custom_call.1} parent=1 // pred_check_branch
      %17 = sbr.rel (0) target = $region5
    $region4: #{tpu_custom_call.1} parent=1 // pred_region
      %19 = vsyncadd [#allocation3], 0
      %s20 = sshll.u32 %s0, 4
      %s21 = int_to_ptr.hbm [resolvable:$true] %s20
      %s22 = sshll.u32 [#allocation2], 4
      %s23 = int_to_ptr.vmem [resolvable:$true] %s22
      %28 = dma.hbm_to_vmem [thread:$0]  %s21, 512, %s23, [#allocation3], 128, 128, 8
    $region5: #{tpu_custom_call.1} parent=1 // pred_fallthru
      _
    // Predicated region
    $region6: #{tpu_custom_call.1} parent=1 // pred_check
      _
    $region7: #{tpu_custom_call.1} parent=1 // pred_check_branch
      %30 = sbr.rel (0) target = $region9
    $region8: #{tpu_custom_call.1} parent=1 // pred_region
      %32 = vsyncadd [#allocation6], 0
      %s33 = sshll.u32 %s1, 4
      %s34 = int_to_ptr.hbm [resolvable:$true] %s33
      %s35 = sshll.u32 [#allocation5], 4
      %s36 = int_to_ptr.vmem [resolvable:$true] %s35
      %41 = dma.hbm_to_vmem [thread:$0]  %s34, 512, %s36, [#allocation6], 128, 128, 8
    $region9: #{tpu_custom_call.1} parent=1 // pred_fallthru
      _
    // Predicated region
    $region10: #{tpu_custom_call.1} parent=1 // pred_check
      _
    $region11: #{tpu_custom_call.1} parent=1 // pred_check_branch
      %43 = sbr.rel (0) target = $region13
    $region12: #{tpu_custom_call.1} parent=1 // pred_region
      _
    $region13: #{tpu_custom_call.1} parent=1 // pred_fallthru
      _
    // Predicated region
    $region14: #{tpu_custom_call.1} parent=1 // pred_check
      _
    $region15: #{tpu_custom_call.1} parent=1 // pred_check_branch
      %45 = sbr.rel (0) target = $region17
    $region16: #{tpu_custom_call.1} parent=1 // pred_region
      _
    $region17: #{tpu_custom_call.1} parent=1 // pred_fallthru
      _
    // Predicated region
    $region18: #{tpu_custom_call.1} parent=1 // pred_check
      _
    $region19: #{tpu_custom_call.1} parent=1 // pred_check_branch
      %47 = sbr.rel (0) target = $region21
    $region20: #{tpu_custom_call.1} parent=1 // pred_region
      %49 = vsyncadd [#allocation6], 0
      %s50 = sshll.u32 %s4, 4
      %s51 = int_to_ptr.hbm [resolvable:$true] %s50
      %s52 = sshll.u32 [#allocation7], 4
      %s53 = int_to_ptr.vmem [resolvable:$true] %s52
      %58 = dma.hbm_to_vmem [thread:$0]  %s51, 2048, %s53, [#allocation6], 128, 128, 8
    $region21: #{tpu_custom_call.1} parent=1 // pred_fallthru
      _
    // Predicated region
    $region22: #{tpu_custom_call.1} parent=1 // pred_check
      _
    $region23: #{tpu_custom_call.1} parent=1 // pred_check_branch
      %60 = sbr.rel (0) target = $region25
    $region24: #{tpu_custom_call.1} parent=1 // pred_region
      %62 = dma.done [#allocation3], 512
    $region25: #{tpu_custom_call.1} parent=1 // pred_fallthru
      _
    // Predicated region
    $region26: #{tpu_custom_call.1} parent=1 // pred_check
      _
    $region27: #{tpu_custom_call.1} parent=1 // pred_check_branch
      %64 = sbr.rel (0) target = $region29
    $region28: #{tpu_custom_call.1} parent=1 // pred_region
      %66 = dma.done [#allocation6], 512
    $region29: #{tpu_custom_call.1} parent=1 // pred_fallthru
      _
    // Predicated region
    $region30: #{tpu_custom_call.1} parent=1 // pred_check
      _
    $region31: #{tpu_custom_call.1} parent=1 // pred_check_branch
      %68 = sbr.rel (0) target = $region33
    $region32: #{tpu_custom_call.1} parent=1 // pred_region
      %70 = dma.done [#allocation6], 2048
    $region33: #{tpu_custom_call.1} parent=1 // pred_fallthru
      _
    %v71 = vld [vmem:[#allocation7] sm:$0xff]
    %v72 = vld [vmem:[#allocation7 + $0x8] sm:$0xff]
    %v73 = vld [vmem:[#allocation7 + $0x10] sm:$0xff]
    %v74 = vld [vmem:[#allocation7 + $0x18] sm:$0xff]
    %v75 = vld [vmem:[#allocation7 + $0x20] sm:$0xff]
    %v76 = vld [vmem:[#allocation7 + $0x28] sm:$0xff]
    %v77 = vld [vmem:[#allocation7 + $0x30] sm:$0xff]
    %v78 = vld [vmem:[#allocation7 + $0x38] sm:$0xff]
    %v79 = vld [vmem:[#allocation7 + $0x40] sm:$0xff]
    %v80 = vld [vmem:[#allocation7 + $0x48] sm:$0xff]
    %v81 = vld [vmem:[#allocation7 + $0x50] sm:$0xff]
    %v82 = vld [vmem:[#allocation7 + $0x58] sm:$0xff]
    %v83 = vld [vmem:[#allocation7 + $0x60] sm:$0xff]
    %v84 = vld [vmem:[#allocation7 + $0x68] sm:$0xff]
    %v85 = vld [vmem:[#allocation7 + $0x70] sm:$0xff]
    %v86 = vld [vmem:[#allocation7 + $0x78] sm:$0xff]
    %v87 = vld [vmem:[%s2] sm:$0x1]
    %v88 = vld [vmem:[%s3] sm:$0x1]
    %v89 = vld [vmem:[#allocation2] sm:$0xff]
    %v90 = vld [vmem:[#allocation2 + $0x8] sm:$0xff]
    %v91 = vld [vmem:[#allocation2 + $0x10] sm:$0xff]
    %v92 = vld [vmem:[#allocation2 + $0x18] sm:$0xff]
    %v93 = vmul.f32 %v89, %v89
    %v94 = vmul.f32 %v90, %v90
    %v95 = vmul.f32 %v91, %v91
    %v96 = vmul.f32 %v92, %v92
    %97 = vmatpush.msra.mxu0 %v86
    %98 = vmatpush.msra.mxu0 %v85
    %99 = vmatpush.msra.mxu0 %v84
    %100 = vmatpush.msra.mxu0 %v83
    %101 = vmatpush.msra.mxu0 %v82
    %102 = vmatpush.msra.mxu0 %v81
    %103 = vmatpush.msra.mxu0 %v80
    %104 = vmatpush.msra.mxu0 %v79
    %105 = vmatpush.msra.mxu0 %v78
    %106 = vmatpush.msra.mxu0 %v77
    %107 = vmatpush.msra.mxu0 %v76
    %108 = vmatpush.msra.mxu0 %v75
    %109 = vmatpush.msra.mxu0 %v74
    %110 = vmatpush.msra.mxu0 %v73
    %111 = vmatpush.msra.mxu0 %v72
    %112 = vmatpush.msra.mxu0 %v71
    %113 = vmatmul.f32.gmra.mxu0 %v93
    %v114 = vpop.f32.mrf.mxu0
    %v115 = vadd.f32 0.0, %v114
    %116 = vmatmul.f32.gmra.mxu0 %v94
    %v117 = vpop.f32.mrf.mxu0
    %v118 = vadd.f32 0.0, %v117
    %119 = vmatmul.f32.gmra.mxu0 %v95
    %v120 = vpop.f32.mrf.mxu0
    %v121 = vadd.f32 0.0, %v120
    %122 = vmatmul.f32.gmra.mxu0 %v96
    %v123 = vpop.f32.mrf.mxu0
    %v124 = vadd.f32 0.0, %v123
    %125 = vdwg.mxu0
    %v126 = vmul.f32 %v115, 0.015625
    %v127 = vmul.f32 %v118, 0.015625
    %v128 = vmul.f32 %v121, 0.015625
    %v129 = vmul.f32 %v124, 0.015625
    %v130 = vadd.f32 %v126, 1e-06
    %v131 = vadd.f32 %v127, 1e-06
    %v132 = vadd.f32 %v128, 1e-06
    %v133 = vadd.f32 %v129, 1e-06
    %v134 = vrsqrt.pop %v130
    %v135 = vmul.f32 %v134, %v130
    %v136 = vmul.f32 %v135, %v134
    %v137 = vmul.f32 0.5, %v136
    %v138 = vsub.f32 1.5, %v137
    %v139 = vmul.f32 %v134, %v138
    %vm140 = vweird.f32 %v130
    %vm141 = vweird.f32 %v134
    %vm142 = vmor %vm140, %vm141
    %v143 = vsel %vm142, %v134, %v139
    %v144 = vrsqrt.pop %v131
    %v145 = vmul.f32 %v144, %v131
    %v146 = vmul.f32 %v145, %v144
    %v147 = vmul.f32 0.5, %v146
    %v148 = vsub.f32 1.5, %v147
    %v149 = vmul.f32 %v144, %v148
    %vm150 = vweird.f32 %v131
    %vm151 = vweird.f32 %v144
    %vm152 = vmor %vm150, %vm151
    %v153 = vsel %vm152, %v144, %v149
    %v154 = vrsqrt.pop %v132
    %v155 = vmul.f32 %v154, %v132
    %v156 = vmul.f32 %v155, %v154
    %v157 = vmul.f32 0.5, %v156
    %v158 = vsub.f32 1.5, %v157
    %v159 = vmul.f32 %v154, %v158
    %vm160 = vweird.f32 %v132
    %vm161 = vweird.f32 %v154
    %vm162 = vmor %vm160, %vm161
    %v163 = vsel %vm162, %v154, %v159
    %v164 = vrsqrt.pop %v133
    %v165 = vmul.f32 %v164, %v133
    %v166 = vmul.f32 %v165, %v164
    %v167 = vmul.f32 0.5, %v166
    %v168 = vsub.f32 1.5, %v167
    %v169 = vmul.f32 %v164, %v168
    %vm170 = vweird.f32 %v133
    %vm171 = vweird.f32 %v164
    %vm172 = vmor %vm170, %vm171
    %v173 = vsel %vm172, %v164, %v169
    %v174 = vmul.f32 %v89, %v143
    %v175 = vmul.f32 %v90, %v153
    %v176 = vmul.f32 %v91, %v163
    %v177 = vmul.f32 %v92, %v173
    %v179 = vperm.slane %v87, 0
    %v181 = vmul.f32 %v174, %v179
    %v182 = vmul.f32 %v175, %v179
    %v183 = vmul.f32 %v176, %v179
    %v184 = vmul.f32 %v177, %v179
    %185 = vst [vmem:[#allocation8] sm:$0xff] %v181
    %186 = vst [vmem:[#allocation8 + $0x8] sm:$0xff] %v182
    %187 = vst [vmem:[#allocation8 + $0x10] sm:$0xff] %v183
    %188 = vst [vmem:[#allocation8 + $0x18] sm:$0xff] %v184
    %v189 = vld [vmem:[#allocation5] sm:$0xff]
    %v190 = vld [vmem:[#allocation5 + $0x8] sm:$0xff]
    %v191 = vld [vmem:[#allocation5 + $0x10] sm:$0xff]
    %v192 = vld [vmem:[#allocation5 + $0x18] sm:$0xff]
    %v193 = vmul.f32 %v189, %v189
    %v194 = vmul.f32 %v190, %v190
    %v195 = vmul.f32 %v191, %v191
    %v196 = vmul.f32 %v192, %v192
    %197 = vmatpush.msra.mxu0 %v86
    %198 = vmatpush.msra.mxu0 %v85
    %199 = vmatpush.msra.mxu0 %v84
    %200 = vmatpush.msra.mxu0 %v83
    %201 = vmatpush.msra.mxu0 %v82
    %202 = vmatpush.msra.mxu0 %v81
    %203 = vmatpush.msra.mxu0 %v80
    %204 = vmatpush.msra.mxu0 %v79
    %205 = vmatpush.msra.mxu0 %v78
    %206 = vmatpush.msra.mxu0 %v77
    %207 = vmatpush.msra.mxu0 %v76
    %208 = vmatpush.msra.mxu0 %v75
    %209 = vmatpush.msra.mxu0 %v74
    %210 = vmatpush.msra.mxu0 %v73
    %211 = vmatpush.msra.mxu0 %v72
    %212 = vmatpush.msra.mxu0 %v71
    %213 = vmatmul.f32.gmra.mxu0 %v193
    %v214 = vpop.f32.mrf.mxu0
    %v215 = vadd.f32 0.0, %v214
    %216 = vmatmul.f32.gmra.mxu0 %v194
    %v217 = vpop.f32.mrf.mxu0
    %v218 = vadd.f32 0.0, %v217
    %219 = vmatmul.f32.gmra.mxu0 %v195
    %v220 = vpop.f32.mrf.mxu0
    %v221 = vadd.f32 0.0, %v220
    %222 = vmatmul.f32.gmra.mxu0 %v196
    %v223 = vpop.f32.mrf.mxu0
    %v224 = vadd.f32 0.0, %v223
    %225 = vdwg.mxu0
    %v226 = vmul.f32 %v215, 0.015625
    %v227 = vmul.f32 %v218, 0.015625
    %v228 = vmul.f32 %v221, 0.015625
    %v229 = vmul.f32 %v224, 0.015625
    %v230 = vadd.f32 %v226, 1e-06
    %v231 = vadd.f32 %v227, 1e-06
    %v232 = vadd.f32 %v228, 1e-06
    %v233 = vadd.f32 %v229, 1e-06
    %v234 = vrsqrt.pop %v230
    %v235 = vmul.f32 %v234, %v230
    %v236 = vmul.f32 %v235, %v234
    %v237 = vmul.f32 0.5, %v236
    %v238 = vsub.f32 1.5, %v237
    %v239 = vmul.f32 %v234, %v238
    %vm240 = vweird.f32 %v230
    %vm241 = vweird.f32 %v234
    %vm242 = vmor %vm240, %vm241
    %v243 = vsel %vm242, %v234, %v239
    %v244 = vrsqrt.pop %v231
    %v245 = vmul.f32 %v244, %v231
    %v246 = vmul.f32 %v245, %v244
    %v247 = vmul.f32 0.5, %v246
    %v248 = vsub.f32 1.5, %v247
    %v249 = vmul.f32 %v244, %v248
    %vm250 = vweird.f32 %v231
    %vm251 = vweird.f32 %v244
    %vm252 = vmor %vm250, %vm251
    %v253 = vsel %vm252, %v244, %v249
    %v254 = vrsqrt.pop %v232
    %v255 = vmul.f32 %v254, %v232
    %v256 = vmul.f32 %v255, %v254
    %v257 = vmul.f32 0.5, %v256
    %v258 = vsub.f32 1.5, %v257
    %v259 = vmul.f32 %v254, %v258
    %vm260 = vweird.f32 %v232
    %vm261 = vweird.f32 %v254
    %vm262 = vmor %vm260, %vm261
    %v263 = vsel %vm262, %v254, %v259
    %v264 = vrsqrt.pop %v233
    %v265 = vmul.f32 %v264, %v233
    %v266 = vmul.f32 %v265, %v264
    %v267 = vmul.f32 0.5, %v266
    %v268 = vsub.f32 1.5, %v267
    %v269 = vmul.f32 %v264, %v268
    %vm270 = vweird.f32 %v233
    %vm271 = vweird.f32 %v264
    %vm272 = vmor %vm270, %vm271
    %v273 = vsel %vm272, %v264, %v269
    %v274 = vmul.f32 %v189, %v243
    %v275 = vmul.f32 %v190, %v253
    %v276 = vmul.f32 %v191, %v263
    %v277 = vmul.f32 %v192, %v273
    %v279 = vperm.slane %v88, 0
    %v281 = vmul.f32 %v274, %v279
    %v282 = vmul.f32 %v275, %v279
    %v283 = vmul.f32 %v276, %v279
    %v284 = vmul.f32 %v277, %v279
    %285 = vst [vmem:[#allocation9] sm:$0xff] %v281
    %286 = vst [vmem:[#allocation9 + $0x8] sm:$0xff] %v282
    %287 = vst [vmem:[#allocation9 + $0x10] sm:$0xff] %v283
    %288 = vst [vmem:[#allocation9 + $0x18] sm:$0xff] %v284
    // Predicated region
    $region34: #{tpu_custom_call.1} parent=1 // pred_check
      _
    $region35: #{tpu_custom_call.1} parent=1 // pred_check_branch
      %290 = sbr.rel (0) target = $region37
    $region36: #{tpu_custom_call.1} parent=1 // pred_region
      %292 = vsyncadd [#allocation4], 0
      %s293 = sshll.u32 [#allocation8], 4
      %s294 = int_to_ptr.vmem [resolvable:$true] %s293
      %s295 = sshll.u32 %s5, 4
      %s296 = int_to_ptr.hbm [resolvable:$true] %s295
      %301 = dma.vmem_to_hbm [thread:$0]  %s294, 512, %s296, [#allocation4], 128, 128, 8
    $region37: #{tpu_custom_call.1} parent=1 // pred_fallthru
      _
    // Predicated region
    $region38: #{tpu_custom_call.1} parent=1 // pred_check
      _
    $region39: #{tpu_custom_call.1} parent=1 // pred_check_branch
      %303 = sbr.rel (0) target = $region41
    $region40: #{tpu_custom_call.1} parent=1 // pred_region
      %305 = vsyncadd [#allocation10], 0
      %s306 = sshll.u32 [#allocation9], 4
      %s307 = int_to_ptr.vmem [resolvable:$true] %s306
      %s308 = sshll.u32 %s6, 4
      %s309 = int_to_ptr.hbm [resolvable:$true] %s308
      %314 = dma.vmem_to_hbm [thread:$0]  %s307, 512, %s309, [#allocation10], 128, 128, 8
    $region41: #{tpu_custom_call.1} parent=1 // pred_fallthru
      _
    // Predicated region
    $region42: #{tpu_custom_call.1} parent=1 // pred_check
      _
    $region43: #{tpu_custom_call.1} parent=1 // pred_check_branch
      %316 = sbr.rel (0) target = $region45
    $region44: #{tpu_custom_call.1} parent=1 // pred_region
      %318 = dma.done [#allocation4], 512
    $region45: #{tpu_custom_call.1} parent=1 // pred_fallthru
      _
    // Predicated region
    $region46: #{tpu_custom_call.1} parent=1 // pred_check
      _
    $region47: #{tpu_custom_call.1} parent=1 // pred_check_branch
      %320 = sbr.rel (0) target = $region49
    $region48: #{tpu_custom_call.1} parent=1 // pred_region
      %322 = dma.done [#allocation10], 512
    $region49: #{tpu_custom_call.1} parent=1 // pred_fallthru
      _
    %323 = vsyncpa [#allocation3], 1
    %324 = vsyncpa [#allocation6], 1
    %325 = vsyncpa [#allocation4], 1
    %326 = vsyncpa [#allocation10], 1

</llo_original>
